<compile_context>
chip_gen: v7x
topology: tpu7x:2x2x1
jax: 0.10.0
libtpu: 0.0.40
codegen_flags: <defaults>
</compile_context>

<pallas_src>
import functools

import jax
import jax.numpy as jnp
from jax.experimental import pallas as pl
from jax.experimental.pallas import tpu as pltpu


def _round_up(a: int, b: int) -> int:
    return ((a + b - 1) // b) * b


def _pick_vmem_limit() -> int:
    """64 MiB scoped VMEM on 128-MiB parts (v5e/v6e); 40 MiB on v7x / unknown."""
    try:
        cap = int(pltpu.get_tpu_info().vmem_capacity_bytes)
    except Exception:
        cap = 0
    if cap >= 128 * 1024 * 1024:
        return 64 * 1024 * 1024
    return 40 * 1024 * 1024


# ----------------------------------------------------------------------------
# Kernels
# ----------------------------------------------------------------------------
def _graph_stats_kernel(x_ref, batch_ref, cnt_ref, sum_ref, ssq_ref, *,
                        num_graphs, num_nodes):
    """Per-tile partial (count, sum(x), sum(x^2)) per graph. Fully parallel grid."""
    t = pl.program_id(0)
    tn = x_ref.shape[0]

    # Validity mask for the ragged node tail (OOB rows of a partial block hold
    # unspecified data; jnp.where keeps NaN/Inf garbage out of the sums).
    row_id = t * tn + jax.lax.broadcasted_iota(jnp.int32, (tn, 1), 0)
    valid = row_id < num_nodes                                       # [TN, 1]

    x = jnp.where(valid, x_ref[...].astype(jnp.float32), jnp.float32(0))  # [TN, C]
    row_sum = jnp.sum(x, axis=-1, keepdims=True)                     # [TN, 1]
    row_ssq = jnp.sum(x * x, axis=-1, keepdims=True)                 # [TN, 1]

    bids = batch_ref[...]                                            # [TN, 1] int32
    gid = jax.lax.broadcasted_iota(jnp.int32, (tn, num_graphs), 1)
    onehot = jnp.where((gid == bids) & valid, jnp.float32(1), jnp.float32(0))  # [TN, B]

    # Sublane reduce to [1, B] and write this tile's partial (distinct block per tile).
    cnt_ref[0] = jnp.sum(onehot, axis=0, keepdims=True)
    sum_ref[0] = jnp.sum(onehot * row_sum, axis=0, keepdims=True)
    ssq_ref[0] = jnp.sum(onehot * row_ssq, axis=0, keepdims=True)


def _graph_apply_kernel(x_ref, stats_ref, w_ref, b_ref, o_ref):
    """Normalize one node tile with precomputed per-node (mean, inv_std)."""
    x = x_ref[...].astype(jnp.float32)                               # [TN, C]
    stats = stats_ref[...]                                           # [TN, 2] f32
    mean_rows = stats[:, 0:1]                                        # [TN, 1]
    inv_rows = stats[:, 1:2]                                         # [TN, 1]
    y = (x - mean_rows) * (inv_rows * w_ref[...]) + b_ref[...]       # [TN, C]
    o_ref[...] = y.astype(o_ref.dtype)   # OOB rows of a partial last block are dropped


def _fused_graph_ln_kernel(x_ref, batch_ref, w_ref, b_ref, o_ref, *,
                           num_graphs, in_channels, eps):
    """Single-pass path: whole problem resident in VMEM (1 HBM read + 1 write)."""
    x = x_ref[...].astype(jnp.float32)                               # [N, C]
    bids = batch_ref[...]                                            # [N, 1]
    n = x_ref.shape[0]

    gid = jax.lax.broadcasted_iota(jnp.int32, (n, num_graphs), 1)
    onehot = jnp.where(gid == bids, jnp.float32(1), jnp.float32(0))  # [N, B]

    row_sum = jnp.sum(x, axis=-1, keepdims=True)                     # [N, 1]
    row_ssq = jnp.sum(x * x, axis=-1, keepdims=True)

    cnt = jnp.sum(onehot, axis=0, keepdims=True)                     # [1, B]
    s = jnp.sum(onehot * row_sum, axis=0, keepdims=True)
    ss = jnp.sum(onehot * row_ssq, axis=0, keepdims=True)

    norm = jnp.maximum(cnt, 1.0) * jnp.float32(in_channels)
    mean = s / norm
    var = jnp.maximum(ss / norm - mean * mean, 0.0)
    inv = jax.lax.rsqrt(var + jnp.float32(eps))

    mean_rows = jnp.sum(onehot * mean, axis=1, keepdims=True)        # [N, 1]
    inv_rows = jnp.sum(onehot * inv, axis=1, keepdims=True)

    y = (x - mean_rows) * (inv_rows * w_ref[...]) + b_ref[...]
    o_ref[...] = y.astype(o_ref.dtype)


# ----------------------------------------------------------------------------
# Wrapper
# ----------------------------------------------------------------------------
def graph_layer_norm(x, batch, weight, bias, *, num_graphs, eps=1e-5,
                     force_two_pass=False, max_tile_rows=None):
    """Pallas implementation of torch_geometric.nn.LayerNorm (mode='graph', batch given)."""
    N, C = x.shape
    B = int(num_graphs)
    out_dtype = x.dtype
    itemsize = jnp.dtype(x.dtype).itemsize

    vmem_limit = _pick_vmem_limit()

    # Tiny reshapes only (no full-array padded copies of x / out).
    batch2d = batch.astype(jnp.int32).reshape(N, 1)
    wp = weight.astype(jnp.float32).reshape(1, C)
    bp = bias.astype(jnp.float32).reshape(1, C)

    # ---- fused single-pass fast path: everything resident in VMEM (1R + 1W) ----
    fused_ws_bytes = 4 * N * (C + B + 4) * 4        # rough f32 working-set bound
    if (not force_two_pass) and fused_ws_bytes <= min(24 * 1024 * 1024, vmem_limit // 2):
        kernel = functools.partial(_fused_graph_ln_kernel, num_graphs=B,
                                   in_channels=C, eps=float(eps))
        return pl.pallas_call(
            kernel,
            out_shape=jax.ShapeDtypeStruct((N, C), out_dtype),
            grid=(1,),
            in_specs=[
                pl.BlockSpec((N, C), lambda i: (0, 0)),   # x (full)
                pl.BlockSpec((N, 1), lambda i: (0, 0)),   # batch ids
                pl.BlockSpec((1, C), lambda i: (0, 0)),   # weight
                pl.BlockSpec((1, C), lambda i: (0, 0)),   # bias
            ],
            out_specs=pl.BlockSpec((N, C), lambda i: (0, 0)),
            compiler_params=pltpu.CompilerParams(
                dimension_semantics=("arbitrary",),
                vmem_limit_bytes=vmem_limit,
            ),
        )(x, batch2d, wp, bp)

    # ---- two-pass tiled path ----
    # dtype-aware tile budget; per-row estimate covers double-buffered in/out DMA
    # buffers, f32 temporaries and the one-hot row of the stats pass.
    per_row_bytes = 2 * C * itemsize + 8 * C + 4 * B + 32
    tile_rows = (vmem_limit // 3) // max(1, per_row_bytes)
    tile_n = max(128, (tile_rows // 128) * 128)
    if max_tile_rows is not None:
        tile_n = max(128, min(tile_n, (max_tile_rows // 128) * 128))
    tile_n = min(tile_n, _round_up(N, 128))
    num_tiles = pl.cdiv(N, tile_n)

    # pass 1: per-tile per-graph partials (count / sum / sumsq); grid is "parallel"
    # so both v7x TensorCores can work on it.
    stats_kernel = functools.partial(_graph_stats_kernel, num_graphs=B, num_nodes=N)
    cnt_p, sum_p, ssq_p = pl.pallas_call(
        stats_kernel,
        out_shape=(jax.ShapeDtypeStruct((num_tiles, 1, B), jnp.float32),) * 3,
        grid=(num_tiles,),
        in_specs=[
            pl.BlockSpec((tile_n, C), lambda t: (t, 0)),   # x tile (no channel padding)
            pl.BlockSpec((tile_n, 1), lambda t: (t, 0)),   # batch ids
        ],
        out_specs=(pl.BlockSpec((1, 1, B), lambda t: (t, 0, 0)),) * 3,
        compiler_params=pltpu.CompilerParams(
            dimension_semantics=("parallel",),
            vmem_limit_bytes=vmem_limit,
        ),
    )(x, batch2d)

    # Tiny XLA glue: reduce partials, per-graph mean / inv_std, per-node gather.
    cnt = jnp.sum(cnt_p, axis=(0, 1))                       # (B,)
    s = jnp.sum(sum_p, axis=(0, 1))
    ss = jnp.sum(ssq_p, axis=(0, 1))
    norm = jnp.maximum(cnt, 1.0) * jnp.float32(C)           # clamp(count,1) * in_channels
    mean = s / norm
    var = jnp.maximum(ss / norm - mean * mean, 0.0)         # E[x^2] - mean^2 (clamped)
    inv = jax.lax.rsqrt(var + jnp.float32(eps))
    b_idx = batch.astype(jnp.int32)
    node_stats = jnp.stack([mean[b_idx], inv[b_idx]], axis=1)  # (N, 2) f32

    # pass 2: normalize + affine; every node tile read/written exactly once.
    out = pl.pallas_call(
        _graph_apply_kernel,
        out_shape=jax.ShapeDtypeStruct((N, C), out_dtype),
        grid=(num_tiles,),
        in_specs=[
            pl.BlockSpec((tile_n, C), lambda t: (t, 0)),    # x tile
            pl.BlockSpec((tile_n, 2), lambda t: (t, 0)),    # per-node (mean, inv_std)
            pl.BlockSpec((1, C), lambda t: (0, 0)),         # weight
            pl.BlockSpec((1, C), lambda t: (0, 0)),         # bias
        ],
        out_specs=pl.BlockSpec((tile_n, C), lambda t: (t, 0)),
        compiler_params=pltpu.CompilerParams(
            dimension_semantics=("parallel",),
            vmem_limit_bytes=vmem_limit,
        ),
    )(x, node_stats, wp, bp)
    return out


# TODO(synk): mode="node" (plain per-row F.layer_norm) and the batch=None graph
# variant (which adds eps to std instead of var) are not implemented in-kernel.


def _reference_graph_layer_norm(x, batch, weight, bias, num_graphs, eps=1e-5):
    """Pure-JAX reference mirroring the PyTorch scatter implementation."""
    xf = x.astype(jnp.float32)
    C = xf.shape[1]
    cnt = jax.ops.segment_sum(jnp.ones((xf.shape[0],), jnp.float32), batch, num_graphs)
    norm = (jnp.maximum(cnt, 1.0) * C).reshape(-1, 1)
    mean = jax.ops.segment_sum(xf, batch, num_graphs).sum(-1, keepdims=True) / norm
    xc = xf - mean[batch]
    var = jax.ops.segment_sum(xc * xc, batch, num_graphs).sum(-1, keepdims=True) / norm
    out = xc / jnp.sqrt(var + eps)[batch]
    return out * weight.astype(jnp.float32) + bias.astype(jnp.float32)


if __name__ == "__main__":
    key = jax.random.PRNGKey(0)

    # Small case: goes through the fused single-pass path.
    N, C, B = 24, 32, 3
    x = jax.random.normal(key, (N, C), dtype=jnp.float32) * 2.0 + 0.5
    batch = jnp.concatenate(
        [jnp.full((8,), 0), jnp.full((10,), 1), jnp.full((6,), 2)]
    ).astype(jnp.int32)
    weight = jnp.ones((C,), dtype=jnp.float32)     # reset_parameters(): ones / zeros
    bias = jnp.zeros((C,), dtype=jnp.float32)

    ref = _reference_graph_layer_norm(x, batch, weight, bias, B, eps=1e-5)

    out_fused = jax.block_until_ready(
        graph_layer_norm(x, batch, weight, bias, num_graphs=B, eps=1e-5))
    assert out_fused.shape == (N, C) and out_fused.dtype == jnp.float32
    assert jnp.allclose(out_fused, ref, atol=1e-4, rtol=1e-4), "fused path mismatch"

    # Same inputs forced through the two-pass tiled path (exercises the ragged-tail mask).
    out_tiled = jax.block_until_ready(
        graph_layer_norm(x, batch, weight, bias, num_graphs=B, eps=1e-5,
                         force_two_pass=True, max_tile_rows=128))
    assert jnp.allclose(out_tiled, ref, atol=1e-4, rtol=1e-4), "tiled path mismatch"

    # Multi-tile case with a partial last tile and non-trivial affine parameters.
    N2, C2, B2 = 300, 64, 4
    k1, k2 = jax.random.split(key)
    x2 = jax.random.normal(k1, (N2, C2), dtype=jnp.float32)
    batch2 = jnp.sort(jax.random.randint(k2, (N2,), 0, B2)).astype(jnp.int32)
    w2 = 1.0 + 0.1 * jax.random.normal(k1, (C2,), dtype=jnp.float32)
    b2 = 0.1 * jax.random.normal(k2, (C2,), dtype=jnp.float32)
    ref2 = _reference_graph_layer_norm(x2, batch2, w2, b2, B2, eps=1e-5)
    out2 = jax.block_until_ready(
        graph_layer_norm(x2, batch2, w2, b2, num_graphs=B2, eps=1e-5,
                         force_two_pass=True, max_tile_rows=128))
    assert jnp.allclose(out2, ref2, atol=1e-4, rtol=1e-4), "multi-tile mismatch"

    print("KERNEL_OK")
</pallas_src>

<mosaic_0001>
module attributes {stable_mosaic.version = 11 : i64} {
  func.func @_fused_graph_ln_kernel(%arg0: i32, %arg1: memref<24x32xf32, #tpu.memory_space<vmem>>, %arg2: memref<24x1xi32, #tpu.memory_space<vmem>>, %arg3: memref<1x32xf32, #tpu.memory_space<vmem>>, %arg4: memref<1x32xf32, #tpu.memory_space<vmem>>, %arg5: memref<24x32xf32, #tpu.memory_space<vmem>>) attributes {dimension_semantics = [#tpu.dimension_semantics<arbitrary>], iteration_bounds = array<i64: 1>, scalar_prefetch = 0 : i64, scratch_operands = 0 : i64, tpu.core_type = #tpu.core_type<tc>, window_params = [{pipeline_mode = #tpu.pipeline_mode<synchronous>, transform_indices = @transform_0, window_bounds = array<i64: 24, 32>}, {pipeline_mode = #tpu.pipeline_mode<synchronous>, transform_indices = @transform_1, window_bounds = array<i64: 24, 1>}, {pipeline_mode = #tpu.pipeline_mode<synchronous>, transform_indices = @transform_2, window_bounds = array<i64: 1, 32>}, {pipeline_mode = #tpu.pipeline_mode<synchronous>, transform_indices = @transform_3, window_bounds = array<i64: 1, 32>}, {pipeline_mode = #tpu.pipeline_mode<synchronous>, transform_indices = @transform_4, window_bounds = array<i64: 24, 32>}]} {
    %c0 = arith.constant 0 : index
    %c0_0 = arith.constant 0 : index
    %0 = vector.load %arg1[%c0, %c0_0] : memref<24x32xf32, #tpu.memory_space<vmem>>, vector<24x32xf32>
    %c0_1 = arith.constant 0 : index
    %c0_2 = arith.constant 0 : index
    %1 = vector.load %arg2[%c0_1, %c0_2] : memref<24x1xi32, #tpu.memory_space<vmem>>, vector<24x1xi32>
    %2 = tpu.iota {dimensions = array<i32: 1>} : vector<24x3xi32>
    %3 = vector.broadcast %1 : vector<24x1xi32> to vector<24x3xi32>
    %4 = arith.cmpi eq, %2, %3 : vector<24x3xi32>
    %cst = arith.constant 1.000000e+00 : f32
    %cst_3 = arith.constant 0.000000e+00 : f32
    %5 = vector.broadcast %cst : f32 to vector<24x3xf32>
    %6 = vector.broadcast %cst_3 : f32 to vector<24x3xf32>
    %7 = arith.select %4, %5, %6 : vector<24x3xi1>, vector<24x3xf32>
    %cst_4 = arith.constant dense<0.000000e+00> : vector<24xf32>
    %8 = vector.multi_reduction <add>, %0, %cst_4 [1] : vector<24x32xf32> to vector<24xf32>
    %9 = vector.shape_cast %8 : vector<24xf32> to vector<24x1xf32>
    %10 = arith.mulf %0, %0 : vector<24x32xf32>
    %cst_5 = arith.constant dense<0.000000e+00> : vector<24xf32>
    %11 = vector.multi_reduction <add>, %10, %cst_5 [1] : vector<24x32xf32> to vector<24xf32>
    %12 = vector.shape_cast %11 : vector<24xf32> to vector<24x1xf32>
    %cst_6 = arith.constant dense<0.000000e+00> : vector<3xf32>
    %13 = vector.multi_reduction <add>, %7, %cst_6 [0] : vector<24x3xf32> to vector<3xf32>
    %14 = vector.shape_cast %13 : vector<3xf32> to vector<1x3xf32>
    %15 = vector.broadcast %9 : vector<24x1xf32> to vector<24x3xf32>
    %16 = arith.mulf %7, %15 : vector<24x3xf32>
    %cst_7 = arith.constant dense<0.000000e+00> : vector<3xf32>
    %17 = vector.multi_reduction <add>, %16, %cst_7 [0] : vector<24x3xf32> to vector<3xf32>
    %18 = vector.shape_cast %17 : vector<3xf32> to vector<1x3xf32>
    %19 = vector.broadcast %12 : vector<24x1xf32> to vector<24x3xf32>
    %20 = arith.mulf %7, %19 : vector<24x3xf32>
    %cst_8 = arith.constant dense<0.000000e+00> : vector<3xf32>
    %21 = vector.multi_reduction <add>, %20, %cst_8 [0] : vector<24x3xf32> to vector<3xf32>
    %22 = vector.shape_cast %21 : vector<3xf32> to vector<1x3xf32>
    %cst_9 = arith.constant 1.000000e+00 : f32
    %23 = vector.broadcast %cst_9 : f32 to vector<1x3xf32>
    %24 = arith.maximumf %14, %23 : vector<1x3xf32>
    %cst_10 = arith.constant 3.200000e+01 : f32
    %25 = vector.broadcast %cst_10 : f32 to vector<1x3xf32>
    %26 = arith.mulf %24, %25 : vector<1x3xf32>
    %27 = arith.divf %18, %26 : vector<1x3xf32>
    %28 = arith.divf %22, %26 : vector<1x3xf32>
    %29 = arith.mulf %27, %27 : vector<1x3xf32>
    %30 = arith.subf %28, %29 : vector<1x3xf32>
    %cst_11 = arith.constant 0.000000e+00 : f32
    %31 = vector.broadcast %cst_11 : f32 to vector<1x3xf32>
    %32 = arith.maximumf %30, %31 : vector<1x3xf32>
    %cst_12 = arith.constant 9.99999974E-6 : f32
    %33 = vector.broadcast %cst_12 : f32 to vector<1x3xf32>
    %34 = arith.addf %32, %33 : vector<1x3xf32>
    %35 = math.rsqrt %34 : vector<1x3xf32>
    %36 = vector.broadcast %27 : vector<1x3xf32> to vector<24x3xf32>
    %37 = arith.mulf %7, %36 : vector<24x3xf32>
    %cst_13 = arith.constant dense<0.000000e+00> : vector<24xf32>
    %38 = vector.multi_reduction <add>, %37, %cst_13 [1] : vector<24x3xf32> to vector<24xf32>
    %39 = vector.shape_cast %38 : vector<24xf32> to vector<24x1xf32>
    %40 = vector.broadcast %35 : vector<1x3xf32> to vector<24x3xf32>
    %41 = arith.mulf %7, %40 : vector<24x3xf32>
    %cst_14 = arith.constant dense<0.000000e+00> : vector<24xf32>
    %42 = vector.multi_reduction <add>, %41, %cst_14 [1] : vector<24x3xf32> to vector<24xf32>
    %43 = vector.shape_cast %42 : vector<24xf32> to vector<24x1xf32>
    %44 = vector.broadcast %39 : vector<24x1xf32> to vector<24x32xf32>
    %45 = arith.subf %0, %44 : vector<24x32xf32>
    %c0_15 = arith.constant 0 : index
    %c0_16 = arith.constant 0 : index
    %46 = vector.load %arg3[%c0_15, %c0_16] : memref<1x32xf32, #tpu.memory_space<vmem>>, vector<1x32xf32>
    %47 = vector.broadcast %43 : vector<24x1xf32> to vector<24x32xf32>
    %48 = vector.broadcast %46 : vector<1x32xf32> to vector<24x32xf32>
    %49 = arith.mulf %47, %48 : vector<24x32xf32>
    %50 = arith.mulf %45, %49 : vector<24x32xf32>
    %c0_17 = arith.constant 0 : index
    %c0_18 = arith.constant 0 : index
    %51 = vector.load %arg4[%c0_17, %c0_18] : memref<1x32xf32, #tpu.memory_space<vmem>>, vector<1x32xf32>
    %52 = vector.broadcast %51 : vector<1x32xf32> to vector<24x32xf32>
    %53 = arith.addf %50, %52 : vector<24x32xf32>
    %c0_19 = arith.constant 0 : index
    %c0_20 = arith.constant 0 : index
    %54 = vector.load %arg5[%c0_19, %c0_20] : memref<24x32xf32, #tpu.memory_space<vmem>>, vector<24x32xf32>
    tpu.vector_store %arg5[%c0_19, %c0_20], %53 {strides = array<i32>} : memref<24x32xf32, #tpu.memory_space<vmem>>, vector<24x32xf32>,
    return
  }
  func.func @transform_0(%arg0: i32) -> (i32, i32) {
    %c0_i32 = arith.constant 0 : i32
    %c0_i32_0 = arith.constant 0 : i32
    %c0_i32_1 = arith.constant 0 : i32
    return %c0_i32, %c0_i32_0 : i32, i32
  }
  func.func @transform_1(%arg0: i32) -> (i32, i32) {
    %c0_i32 = arith.constant 0 : i32
    %c0_i32_0 = arith.constant 0 : i32
    %c0_i32_1 = arith.constant 0 : i32
    return %c0_i32, %c0_i32_0 : i32, i32
  }
  func.func @transform_2(%arg0: i32) -> (i32, i32) {
    %c0_i32 = arith.constant 0 : i32
    %c0_i32_0 = arith.constant 0 : i32
    %c0_i32_1 = arith.constant 0 : i32
    return %c0_i32, %c0_i32_0 : i32, i32
  }
  func.func @transform_3(%arg0: i32) -> (i32, i32) {
    %c0_i32 = arith.constant 0 : i32
    %c0_i32_0 = arith.constant 0 : i32
    %c0_i32_1 = arith.constant 0 : i32
    return %c0_i32, %c0_i32_0 : i32, i32
  }
  func.func @transform_4(%arg0: i32) -> (i32, i32) {
    %c0_i32 = arith.constant 0 : i32
    %c0_i32_0 = arith.constant 0 : i32
    %c0_i32_1 = arith.constant 0 : i32
    return %c0_i32, %c0_i32_0 : i32, i32
  }
}

</mosaic_0001>

<llo_original>
// kernel: tpu_custom_call.1
$region0: #{tpu_custom_call.1}
  #allocation0 [shape = 'u32[]', space=smem, size = 0x4, offset = 0x4, fixed_abs, tag = 'smem constant byte address 0x4 - core index']
  #allocation1 [shape = 'u32[144,128]{1,0:T(1,128)}', space=vmem, size = 0x12000, scoped, tag = 'internal scratch']
  %s0 = inlined_call_operand.vmem [shape: f32[24,32], index: 0, kind: input, shape index: {}]
  %s1 = inlined_call_operand.vmem [shape: s32[24,1], index: 1, kind: input, shape index: {}]
  %s2 = inlined_call_operand.vmem [shape: f32[1,32], index: 2, kind: input, shape index: {}]
  %s3 = inlined_call_operand.vmem [shape: f32[1,32], index: 3, kind: input, shape index: {}]
  %s4 = inlined_call_operand.hbm [shape: f32[24,32], index: 4, kind: output, shape index: {}]
  %s5 = sld [smem:[#allocation0]]
  $region26: #{tpu_custom_call.1} parent=0
    _
  %s7 = ssub.s32 1, %s5
  %s8 = scalar_select 0, %s7, %s5
  $region1: #{tpu_custom_call.1} parent=0
    #allocation2 [shape = 'u8[12288]{0}', space=vmem, size = 0x3000, scoped, tag = 'output window, operand 0, single buffered']
    #allocation3 [shape = 's32[1]{0}', space=sflag, size = 0x4, scoped, tag = 'scoped memory for tpu_custom_call.1']
    %9 = vsyncpa [#allocation3], 0
    // Predicated region
    $region2: #{tpu_custom_call.1} parent=1 // pred_check
      _
    $region3: #{tpu_custom_call.1} parent=1 // pred_check_branch
      %11 = sbr.rel (0) target = $region5
    $region4: #{tpu_custom_call.1} parent=1 // pred_region
      _
    $region5: #{tpu_custom_call.1} parent=1 // pred_fallthru
      _
    // Predicated region
    $region6: #{tpu_custom_call.1} parent=1 // pred_check
      _
    $region7: #{tpu_custom_call.1} parent=1 // pred_check_branch
      %13 = sbr.rel (0) target = $region9
    $region8: #{tpu_custom_call.1} parent=1 // pred_region
      _
    $region9: #{tpu_custom_call.1} parent=1 // pred_fallthru
      _
    // Predicated region
    $region10: #{tpu_custom_call.1} parent=1 // pred_check
      _
    $region11: #{tpu_custom_call.1} parent=1 // pred_check_branch
      %15 = sbr.rel (0) target = $region13
    $region12: #{tpu_custom_call.1} parent=1 // pred_region
      _
    $region13: #{tpu_custom_call.1} parent=1 // pred_fallthru
      _
    // Predicated region
    $region14: #{tpu_custom_call.1} parent=1 // pred_check
      _
    $region15: #{tpu_custom_call.1} parent=1 // pred_check_branch
      %17 = sbr.rel (0) target = $region17
    $region16: #{tpu_custom_call.1} parent=1 // pred_region
      _
    $region17: #{tpu_custom_call.1} parent=1 // pred_fallthru
      _
    %v18 = vld [vmem:[%s0] sm:$0xff]
    %v19 = vld [vmem:[%s0 + $0x8] sm:$0xff]
    %v20 = vld [vmem:[%s0 + $0x10] sm:$0xff]
    %v21 = vld [vmem:[%s1] sm:$0xff]
    %v22 = vld [vmem:[%s1 + $0x8] sm:$0xff]
    %v23 = vld [vmem:[%s1 + $0x10] sm:$0xff]
    %v24 = vlaneseq
    %v25 = vand.u32 %v24, 127
    %26 = vset.pattern.permute.xlu0 0
    %27 = vperm.xlu0 %26, %v21
    %v28 = vpop.permute.xlu0 %27
    %29 = vset.pattern.permute.xlu0 0
    %30 = vperm.xlu0 %29, %v22
    %v31 = vpop.permute.xlu0 %30
    %32 = vset.pattern.permute.xlu0 0
    %33 = vperm.xlu0 %32, %v23
    %v34 = vpop.permute.xlu0 %33
    %vm35 = vcmp.eq.s32.totalorder %v25, %v28
    %vm36 = vcmp.eq.s32.totalorder %v25, %v31
    %vm37 = vcmp.eq.s32.totalorder %v25, %v34
    %v38 = vsel %vm35, 1.0, 0.0
    %v39 = vsel %vm36, 1.0, 0.0
    %v40 = vsel %vm37, 1.0, 0.0
    %vm41 = vcmask 261120
    %v42 = vsel %vm41, %v18, 0.0
    %43 = vadd.xlane.f32.xlu0 %v42
    %v44 = vpop.xlane.xlu0 %43
    %v45 = vsel %vm41, %v19, 0.0
    %46 = vadd.xlane.f32.xlu0 %v45
    %v47 = vpop.xlane.xlu0 %46
    %v48 = vsel %vm41, %v20, 0.0
    %49 = vadd.xlane.f32.xlu0 %v48
    %v50 = vpop.xlane.xlu0 %49
    %v51 = vmul.f32 %v18, %v18
    %v52 = vmul.f32 %v19, %v19
    %v53 = vmul.f32 %v20, %v20
    %v54 = vsel %vm41, %v51, 0.0
    %55 = vadd.xlane.f32.xlu0 %v54
    %v56 = vpop.xlane.xlu0 %55
    %v57 = vsel %vm41, %v52, 0.0
    %58 = vadd.xlane.f32.xlu0 %v57
    %v59 = vpop.xlane.xlu0 %58
    %v60 = vsel %vm41, %v53, 0.0
    %61 = vadd.xlane.f32.xlu0 %v60
    %v62 = vpop.xlane.xlu0 %61
    %vm63 = vcmask 23552
    %v64 = vsel %vm63, %v38, 0.0
    %v65 = vsel %vm63, %v39, 0.0
    %v66 = vadd.f32 %v64, %v65
    %v67 = vsel %vm63, %v40, 0.0
    %v68 = vadd.f32 %v66, %v67
    %v69 = vrot.slane %v68, 4
    %v70 = vadd.f32 %v68, %v69
    %v71 = vrot.slane %v70, 2
    %v72 = vadd.f32 %v70, %v71
    %v73 = vrot.slane %v72, 1
    %v74 = vadd.f32 %v72, %v73
    %v75 = vmul.f32 %v38, %v44
    %v76 = vmul.f32 %v39, %v47
    %v77 = vmul.f32 %v40, %v50
    %v78 = vsel %vm63, %v75, 0.0
    %v79 = vsel %vm63, %v76, 0.0
    %v80 = vadd.f32 %v78, %v79
    %v81 = vsel %vm63, %v77, 0.0
    %v82 = vadd.f32 %v80, %v81
    %v83 = vrot.slane %v82, 4
    %v84 = vadd.f32 %v82, %v83
    %v85 = vrot.slane %v84, 2
    %v86 = vadd.f32 %v84, %v85
    %v87 = vrot.slane %v86, 1
    %v88 = vadd.f32 %v86, %v87
    %v89 = vmul.f32 %v38, %v56
    %v90 = vmul.f32 %v39, %v59
    %v91 = vmul.f32 %v40, %v62
    %v92 = vsel %vm63, %v89, 0.0
    %v93 = vsel %vm63, %v90, 0.0
    %v94 = vadd.f32 %v92, %v93
    %v95 = vsel %vm63, %v91, 0.0
    %v96 = vadd.f32 %v94, %v95
    %v97 = vrot.slane %v96, 4
    %v98 = vadd.f32 %v96, %v97
    %v99 = vrot.slane %v98, 2
    %v100 = vadd.f32 %v98, %v99
    %v101 = vrot.slane %v100, 1
    %v102 = vadd.f32 %v100, %v101
    %v103 = vmax.f32 %v74, 1.0
    %v104 = vmul.f32 %v103, 32.0
    %v105 = vrcp.pop %v104
    %v106 = vmul.f32 %v88, %v105
    %v107 = vmul.f32 %v102, %v105
    %v108 = vmul.f32 %v106, %v106
    %v109 = vsub.f32 %v107, %v108
    %v110 = vmax.f32 %v109, 0.0
    %v111 = vadd.f32 %v110, 1e-05
    %v112 = vrsqrt.pop %v111
    %v113 = vmul.f32 %v38, %v106
    %v114 = vmul.f32 %v39, %v106
    %v115 = vmul.f32 %v40, %v106
    %v116 = vsel %vm63, %v113, 0.0
    %117 = vadd.xlane.f32.xlu0 %v116
    %v118 = vpop.xlane.xlu0 %117
    %v119 = vsel %vm63, %v114, 0.0
    %120 = vadd.xlane.f32.xlu0 %v119
    %v121 = vpop.xlane.xlu0 %120
    %v122 = vsel %vm63, %v115, 0.0
    %123 = vadd.xlane.f32.xlu0 %v122
    %v124 = vpop.xlane.xlu0 %123
    %v125 = vmul.f32 %v38, %v112
    %v126 = vmul.f32 %v39, %v112
    %v127 = vmul.f32 %v40, %v112
    %v128 = vsel %vm63, %v125, 0.0
    %129 = vadd.xlane.f32.xlu0 %v128
    %v130 = vpop.xlane.xlu0 %129
    %v131 = vsel %vm63, %v126, 0.0
    %132 = vadd.xlane.f32.xlu0 %v131
    %v133 = vpop.xlane.xlu0 %132
    %v134 = vsel %vm63, %v127, 0.0
    %135 = vadd.xlane.f32.xlu0 %v134
    %v136 = vpop.xlane.xlu0 %135
    %v137 = vsub.f32 %v18, %v118
    %v138 = vsub.f32 %v19, %v121
    %v139 = vsub.f32 %v20, %v124
    %v140 = vld [vmem:[%s2] sm:$0x1]
    %v142 = vlaneseq
    %v143 = vshrl.u32 %v142, 7
    %v144 = vsub.s32 0, %v143
    %v145 = vrot.slane %v140, %v144
    %v147 = vmul.f32 %v130, %v145
    %v148 = vmul.f32 %v133, %v145
    %v149 = vmul.f32 %v136, %v145
    %v150 = vmul.f32 %v137, %v147
    %v151 = vmul.f32 %v138, %v148
    %v152 = vmul.f32 %v139, %v149
    %v153 = vld [vmem:[%s3] sm:$0x1]
    %v155 = vlaneseq
    %v156 = vshrl.u32 %v155, 7
    %v157 = vsub.s32 0, %v156
    %v158 = vrot.slane %v153, %v157
    %v160 = vadd.f32 %v150, %v158
    %v161 = vadd.f32 %v151, %v158
    %v162 = vadd.f32 %v152, %v158
    %163 = vst.msk [vmem:[#allocation2] sm:$0xff] %vm41, %v160
    %164 = vst.msk [vmem:[#allocation2 + $0x8] sm:$0xff] %vm41, %v161
    %165 = vst.msk [vmem:[#allocation2 + $0x10] sm:$0xff] %vm41, %v162
    // Predicated region
    $region18: #{tpu_custom_call.1} parent=1 // pred_check
      _
    $region19: #{tpu_custom_call.1} parent=1 // pred_check_branch
      %167 = sbr.rel (0) target = $region21
    $region20: #{tpu_custom_call.1} parent=1 // pred_region
      %s169 = ssub.s32 384, 384
      %170 = vsyncadd [#allocation3], %s169
      %s171 = sshll.u32 [#allocation2], 4
      %s172 = int_to_ptr.vmem [resolvable:$true] %s171
      %177 = dma.vmem_to_hbm [thread:$0]  %s172, 384, %s4, [#allocation3], 128, 128, 8
    $region21: #{tpu_custom_call.1} parent=1 // pred_fallthru
      _
    // Predicated region
    $region22: #{tpu_custom_call.1} parent=1 // pred_check
      _
    $region23: #{tpu_custom_call.1} parent=1 // pred_check_branch
      %179 = sbr.rel (0) target = $region25
    $region24: #{tpu_custom_call.1} parent=1 // pred_region
      %180 = dma.done [#allocation3], 384
    $region25: #{tpu_custom_call.1} parent=1 // pred_fallthru
      _
    %181 = vsyncpa [#allocation3], 1

</llo_original>
